<compile_context>
chip_gen: v7x
topology: tpu7x:2x2x1
jax: 0.10.0
libtpu: 0.0.40
codegen_flags: <defaults>
</compile_context>

<pallas_src>
import functools

import jax
import jax.numpy as jnp
from jax.experimental import pallas as pl
from jax.experimental.pallas import tpu as pltpu

IN_DIM = 3
HIDDEN = 256
OUT_DIM = 2
N3_PAD = 128  # layer-3 MXU width (W3 zero-padded from 2 cols); only 2 cols stored


def _round_up(x, m):
    return ((x + m - 1) // m) * m


def _pick_tile_m(B):
    """Batch tile: large enough to amortize the ~0.35us per-grid-step overhead,
    but keep >=2 grid steps for mid-size B so v7x's second TensorCore gets work."""
    if B <= 256:
        return max(8, _round_up(B, 8))
    if B <= 4096:
        return _round_up(pl.cdiv(B, 2), 256)
    return 2048


def mlp_kernel(x_ref, w1_ref, b1_ref, w2_ref, b2_ref, w3_ref, b3_ref, o_ref):
    # ---- Layer 1: K=3 contraction on the (otherwise idle) MXU, f32 in / f32 acc.
    #      Keeps the VALU free; no bf16 elementwise, so it is also valid on v5e.
    h1 = jnp.dot(x_ref[...], w1_ref[...], preferred_element_type=jnp.float32)
    h1 = jnp.maximum(h1 + b1_ref[...], 0.0)                  # (tile_m, 256) f32

    # ---- Layer 2: (tile_m, 256) @ (256, 256) on the MXU, bf16 in / f32 accumulate.
    h2 = jnp.dot(h1.astype(jnp.bfloat16), w2_ref[...],
                 preferred_element_type=jnp.float32)
    h2 = jnp.maximum(h2 + b2_ref[...], 0.0)                  # (tile_m, 256) f32

    # ---- Layer 3: (tile_m, 256) @ (256, 128) on the MXU (zero-padded from 2 cols).
    #      Store only the 2 real output columns: masked 2-lane vst is negligible
    #      vs 64x less HBM writeback and no post-kernel slice pass.
    y = jnp.dot(h2.astype(jnp.bfloat16), w3_ref[...],
                preferred_element_type=jnp.float32)
    o_ref[...] = (y[:, :OUT_DIM] + b3_ref[...]).astype(o_ref.dtype)


def prepare_params(w1, b1, w2, b2, w3, b3):
    """One-time parameter prep (hoisted out of the per-call jitted forward):
    f32 W1/biases, bf16 W2, bf16 W3 zero-padded to a 128-wide MXU tile."""
    return (
        w1.astype(jnp.float32),
        b1.astype(jnp.float32).reshape(1, HIDDEN),
        w2.astype(jnp.bfloat16),
        b2.astype(jnp.float32).reshape(1, HIDDEN),
        jnp.pad(w3.astype(jnp.bfloat16), ((0, 0), (0, N3_PAD - OUT_DIM))),
        b3.astype(jnp.float32).reshape(1, OUT_DIM),
    )


@functools.partial(jax.jit, static_argnames=("tile_m",))
def simple_nn_forward(x, w1, b1, w2, b2, w3p, b3, *, tile_m=None):
    """Forward pass. x: (B, 3) f32; params from prepare_params().

    tile_m: batch tile. Default picks ~2048 for large B (amortizes grid-step
    overhead on v5e/v6e/v7x alike) while keeping >=2 grid steps for mid-size B
    so both v7x TensorCores are engaged via the "parallel" batch axis."""
    B = x.shape[0]
    if tile_m is None:
        tile_m = _pick_tile_m(B)
    tile_m = min(tile_m, max(8, _round_up(B, 8)))
    grid = (pl.cdiv(B, tile_m),)

    # Weights/biases use a constant (0, 0) index_map -> VMEM-resident across grid
    # steps.  (pipeline_mode=pl.Buffered(1) could drop their 2nd buffer, but that
    # saves only a few hundred KiB and is irrelevant at these tile sizes.)
    resident = lambda a: pl.BlockSpec(a.shape, lambda i: (0, 0))

    flops = 2 * B * (IN_DIM * HIDDEN + HIDDEN * HIDDEN + HIDDEN * N3_PAD)
    bytes_accessed = (
        x.size * 4 + w1.size * 4 + b1.size * 4 + w2.size * 2 + b2.size * 4
        + w3p.size * 2 + b3.size * 4 + B * OUT_DIM * 4)

    # Explicit VMEM budget: double-buffered x/out tiles (lane-padded f32) plus
    # generous scratch for the (tile_m, 256) f32 intermediates; clamped to stay
    # under v7x's 64 MiB physical cap and never below the 16 MiB v5e default.
    vmem_est = 4 * tile_m * 128 * 4 + 6 * tile_m * HIDDEN * 4 + (2 << 20)
    vmem_limit = int(min(max(vmem_est + (4 << 20), 16 << 20), 56 << 20))

    return pl.pallas_call(
        mlp_kernel,
        out_shape=jax.ShapeDtypeStruct((B, OUT_DIM), jnp.float32),
        grid=grid,
        in_specs=[
            pl.BlockSpec((tile_m, IN_DIM), lambda i: (i, 0)),   # x tiled over batch
            resident(w1), resident(b1),
            resident(w2), resident(b2),
            resident(w3p), resident(b3),
        ],
        out_specs=pl.BlockSpec((tile_m, OUT_DIM), lambda i: (i, 0)),
        compiler_params=pltpu.CompilerParams(
            dimension_semantics=("parallel",),
            vmem_limit_bytes=vmem_limit),
        cost_estimate=pl.CostEstimate(
            flops=flops, transcendentals=0, bytes_accessed=bytes_accessed),
    )(x, w1, b1, w2, b2, w3p, b3)


def init_params(key):
    """Deterministic init mimicking nn.Linear default (uniform +/- 1/sqrt(fan_in)).

    Weights stored as (in_features, out_features) so the kernel computes x @ W + b,
    identical to F.linear(x, W_torch) with W_torch = W.T."""
    dims = [(IN_DIM, HIDDEN), (HIDDEN, HIDDEN), (HIDDEN, OUT_DIM)]
    params = []
    for fan_in, fan_out in dims:
        kw, kb, key = jax.random.split(key, 3)
        bound = 1.0 / jnp.sqrt(jnp.float32(fan_in))
        w = jax.random.uniform(kw, (fan_in, fan_out), jnp.float32, -bound, bound)
        b = jax.random.uniform(kb, (1, fan_out), jnp.float32, -bound, bound)
        params += [w, b]
    return params


def reference_forward(x, w1, b1, w2, b2, w3, b3):
    """Pure-JAX reference mirroring the kernel's numerics (f32 layer 1, bf16 weight
    storage + bf16 activations with f32 accumulation for layers 2 and 3)."""
    bf = lambda a: a.astype(jnp.bfloat16).astype(jnp.float32)
    h1 = jnp.maximum(x @ w1 + b1, 0.0)
    h2 = jnp.maximum(bf(h1) @ bf(w2) + b2, 0.0)
    return bf(h2) @ bf(w3) + b3


# TODO(synk): train_net (Adam optimizer step / MSE backward) is training logic, not
# part of the forward pass, and is intentionally not implemented as a kernel.

if __name__ == "__main__":
    key = jax.random.PRNGKey(0)
    key_x, key_p = jax.random.split(key)

    raw_params = init_params(key_p)
    params = prepare_params(*raw_params)

    # Small smoke test (single grid step).
    B = 8
    x = jax.random.normal(key_x, (B, IN_DIM), dtype=jnp.float32)
    y = jax.block_until_ready(simple_nn_forward(x, *params))
    y_ref = reference_forward(x, *raw_params)
    assert y.shape == (B, OUT_DIM)
    assert jnp.allclose(y, y_ref, atol=1e-2, rtol=1e-2), "mismatch vs reference (B=8)"

    # Multi-step grid check (2 batch tiles; exercises resident weights + pipelining
    # + the masked (tile_m, 2) writeback across steps).
    B2 = 512
    x2 = jax.random.normal(jax.random.PRNGKey(1), (B2, IN_DIM), dtype=jnp.float32)
    y2 = jax.block_until_ready(simple_nn_forward(x2, *params))
    y2_ref = reference_forward(x2, *raw_params)
    assert y2.shape == (B2, OUT_DIM)
    assert jnp.allclose(y2, y2_ref, atol=1e-2, rtol=1e-2), "mismatch vs reference (B=512)"

    print("KERNEL_OK")
</pallas_src>

<mosaic_0001>
module attributes {stable_mosaic.version = 11 : i64} {
  func.func @mlp_kernel(%arg0: i32, %arg1: memref<8x3xf32, #tpu.memory_space<vmem>>, %arg2: memref<3x256xf32, #tpu.memory_space<vmem>>, %arg3: memref<1x256xf32, #tpu.memory_space<vmem>>, %arg4: memref<256x256xbf16, #tpu.memory_space<vmem>>, %arg5: memref<1x256xf32, #tpu.memory_space<vmem>>, %arg6: memref<256x128xbf16, #tpu.memory_space<vmem>>, %arg7: memref<1x2xf32, #tpu.memory_space<vmem>>, %arg8: memref<8x2xf32, #tpu.memory_space<vmem>>) attributes {dimension_semantics = [#tpu.dimension_semantics<parallel>], iteration_bounds = array<i64: 1>, scalar_prefetch = 0 : i64, scratch_operands = 0 : i64, tpu.core_type = #tpu.core_type<tc>, window_params = [{transform_indices = @transform_0, window_bounds = array<i64: 8, 3>}, {pipeline_mode = #tpu.pipeline_mode<synchronous>, transform_indices = @transform_1, window_bounds = array<i64: 3, 256>}, {pipeline_mode = #tpu.pipeline_mode<synchronous>, transform_indices = @transform_2, window_bounds = array<i64: 1, 256>}, {pipeline_mode = #tpu.pipeline_mode<synchronous>, transform_indices = @transform_3, window_bounds = array<i64: 256, 256>}, {pipeline_mode = #tpu.pipeline_mode<synchronous>, transform_indices = @transform_4, window_bounds = array<i64: 1, 256>}, {pipeline_mode = #tpu.pipeline_mode<synchronous>, transform_indices = @transform_5, window_bounds = array<i64: 256, 128>}, {pipeline_mode = #tpu.pipeline_mode<synchronous>, transform_indices = @transform_6, window_bounds = array<i64: 1, 2>}, {transform_indices = @transform_7, window_bounds = array<i64: 8, 2>}]} {
    %c0 = arith.constant 0 : index
    %c0_0 = arith.constant 0 : index
    %0 = vector.load %arg1[%c0, %c0_0] : memref<8x3xf32, #tpu.memory_space<vmem>>, vector<8x3xf32>
    %c0_1 = arith.constant 0 : index
    %c0_2 = arith.constant 0 : index
    %1 = vector.load %arg2[%c0_1, %c0_2] : memref<3x256xf32, #tpu.memory_space<vmem>>, vector<3x256xf32>
    %cst = arith.constant dense<0.000000e+00> : vector<8x256xf32>
    %2 = tpu.matmul %0, %1, %cst {dimension_numbers = #tpu.dot_dimension_numbers<[1], [0], [0], [1], [0, 0, 1, 1], [], []>} : vector<8x3xf32>, vector<3x256xf32>, vector<8x256xf32> -> vector<8x256xf32>
    %c0_3 = arith.constant 0 : index
    %c0_4 = arith.constant 0 : index
    %3 = vector.load %arg3[%c0_3, %c0_4] : memref<1x256xf32, #tpu.memory_space<vmem>>, vector<1x256xf32>
    %4 = vector.broadcast %3 : vector<1x256xf32> to vector<8x256xf32>
    %5 = arith.addf %2, %4 : vector<8x256xf32>
    %cst_5 = arith.constant 0.000000e+00 : f32
    %6 = vector.broadcast %cst_5 : f32 to vector<8x256xf32>
    %7 = arith.maximumf %5, %6 : vector<8x256xf32>
    %8 = arith.truncf %7 : vector<8x256xf32> to vector<8x256xbf16>
    %c0_6 = arith.constant 0 : index
    %c0_7 = arith.constant 0 : index
    %9 = vector.load %arg4[%c0_6, %c0_7] : memref<256x256xbf16, #tpu.memory_space<vmem>>, vector<256x256xbf16>
    %cst_8 = arith.constant dense<0.000000e+00> : vector<8x256xf32>
    %10 = tpu.matmul %8, %9, %cst_8 {dimension_numbers = #tpu.dot_dimension_numbers<[1], [0], [0], [1], [0, 0, 1, 1], [], []>} : vector<8x256xbf16>, vector<256x256xbf16>, vector<8x256xf32> -> vector<8x256xf32>
    %c0_9 = arith.constant 0 : index
    %c0_10 = arith.constant 0 : index
    %11 = vector.load %arg5[%c0_9, %c0_10] : memref<1x256xf32, #tpu.memory_space<vmem>>, vector<1x256xf32>
    %12 = vector.broadcast %11 : vector<1x256xf32> to vector<8x256xf32>
    %13 = arith.addf %10, %12 : vector<8x256xf32>
    %cst_11 = arith.constant 0.000000e+00 : f32
    %14 = vector.broadcast %cst_11 : f32 to vector<8x256xf32>
    %15 = arith.maximumf %13, %14 : vector<8x256xf32>
    %16 = arith.truncf %15 : vector<8x256xf32> to vector<8x256xbf16>
    %c0_12 = arith.constant 0 : index
    %c0_13 = arith.constant 0 : index
    %17 = vector.load %arg6[%c0_12, %c0_13] : memref<256x128xbf16, #tpu.memory_space<vmem>>, vector<256x128xbf16>
    %cst_14 = arith.constant dense<0.000000e+00> : vector<8x128xf32>
    %18 = tpu.matmul %16, %17, %cst_14 {dimension_numbers = #tpu.dot_dimension_numbers<[1], [0], [0], [1], [0, 0, 1, 1], [], []>} : vector<8x256xbf16>, vector<256x128xbf16>, vector<8x128xf32> -> vector<8x128xf32>
    %19 = vector.extract_strided_slice %18 {offsets = [0, 0], sizes = [8, 2], strides = [1, 1]} : vector<8x128xf32> to vector<8x2xf32>
    %c0_15 = arith.constant 0 : index
    %c0_16 = arith.constant 0 : index
    %20 = vector.load %arg7[%c0_15, %c0_16] : memref<1x2xf32, #tpu.memory_space<vmem>>, vector<1x2xf32>
    %21 = vector.broadcast %20 : vector<1x2xf32> to vector<8x2xf32>
    %22 = arith.addf %19, %21 : vector<8x2xf32>
    %c0_17 = arith.constant 0 : index
    %c0_18 = arith.constant 0 : index
    %23 = vector.load %arg8[%c0_17, %c0_18] : memref<8x2xf32, #tpu.memory_space<vmem>>, vector<8x2xf32>
    tpu.vector_store %arg8[%c0_17, %c0_18], %22 {strides = array<i32>} : memref<8x2xf32, #tpu.memory_space<vmem>>, vector<8x2xf32>,
    return
  }
  func.func @transform_0(%arg0: i32) -> (i32, i32) {
    %c0_i32 = arith.constant 0 : i32
    %c0_i32_0 = arith.constant 0 : i32
    return %arg0, %c0_i32 : i32, i32
  }
  func.func @transform_1(%arg0: i32) -> (i32, i32) {
    %c0_i32 = arith.constant 0 : i32
    %c0_i32_0 = arith.constant 0 : i32
    %c0_i32_1 = arith.constant 0 : i32
    return %c0_i32, %c0_i32_0 : i32, i32
  }
  func.func @transform_2(%arg0: i32) -> (i32, i32) {
    %c0_i32 = arith.constant 0 : i32
    %c0_i32_0 = arith.constant 0 : i32
    %c0_i32_1 = arith.constant 0 : i32
    return %c0_i32, %c0_i32_0 : i32, i32
  }
  func.func @transform_3(%arg0: i32) -> (i32, i32) {
    %c0_i32 = arith.constant 0 : i32
    %c0_i32_0 = arith.constant 0 : i32
    %c0_i32_1 = arith.constant 0 : i32
    return %c0_i32, %c0_i32_0 : i32, i32
  }
  func.func @transform_4(%arg0: i32) -> (i32, i32) {
    %c0_i32 = arith.constant 0 : i32
    %c0_i32_0 = arith.constant 0 : i32
    %c0_i32_1 = arith.constant 0 : i32
    return %c0_i32, %c0_i32_0 : i32, i32
  }
  func.func @transform_5(%arg0: i32) -> (i32, i32) {
    %c0_i32 = arith.constant 0 : i32
    %c0_i32_0 = arith.constant 0 : i32
    %c0_i32_1 = arith.constant 0 : i32
    return %c0_i32, %c0_i32_0 : i32, i32
  }
  func.func @transform_6(%arg0: i32) -> (i32, i32) {
    %c0_i32 = arith.constant 0 : i32
    %c0_i32_0 = arith.constant 0 : i32
    %c0_i32_1 = arith.constant 0 : i32
    return %c0_i32, %c0_i32_0 : i32, i32
  }
  func.func @transform_7(%arg0: i32) -> (i32, i32) {
    %c0_i32 = arith.constant 0 : i32
    %c0_i32_0 = arith.constant 0 : i32
    return %arg0, %c0_i32 : i32, i32
  }
}

</mosaic_0001>

<llo_original>
// kernel: simple_nn_forward.1
$region0: #{simple_nn_forward.1}
  #allocation0 [shape = 'u32[]', space=smem, size = 0x4, offset = 0x4, fixed_abs, tag = 'smem constant byte address 0x4 - core index']
  #allocation1 [shape = 'u32[144,128]{1,0:T(1,128)}', space=vmem, size = 0x12000, scoped, tag = 'internal scratch']
  %s0 = inlined_call_operand.vmem [shape: f32[8,3], index: 0, kind: input, shape index: {}]
  %s1 = inlined_call_operand.vmem [shape: f32[3,256], index: 1, kind: input, shape index: {}]
  %s2 = inlined_call_operand.vmem [shape: f32[1,256], index: 2, kind: input, shape index: {}]
  %s3 = inlined_call_operand.hbm [shape: bf16[256,256], index: 3, kind: input, shape index: {}]
  %s4 = inlined_call_operand.vmem [shape: f32[1,256], index: 4, kind: input, shape index: {}]
  %s5 = inlined_call_operand.hbm [shape: bf16[256,128], index: 5, kind: input, shape index: {}]
  %s6 = inlined_call_operand.vmem [shape: f32[1,2], index: 6, kind: input, shape index: {}]
  %s7 = inlined_call_operand.vmem [shape: f32[8,2], index: 7, kind: output, shape index: {}]
  %s8 = sld [smem:[#allocation0]]
  $region46: #{simple_nn_forward.1} parent=0
    _
  %s10 = ssub.s32 1, %s8
  %s11 = scalar_select 0, %s10, %s8
  $region1: #{simple_nn_forward.1} parent=0
    #allocation2 [shape = 'u8[131072]{0}', space=vmem, size = 0x20000, scoped, tag = 'input window, operand 3, single buffered']
    #allocation3 [shape = 's32[1]{0}', space=sflag, size = 0x4, scoped, tag = 'scoped memory for simple_nn_forward.1']
    #allocation4 [shape = 'u8[65536]{0}', space=vmem, size = 0x10000, scoped, tag = 'input window, operand 5, single buffered']
    #allocation5 [shape = 's32[1]{0}', space=sflag, size = 0x4, scoped, tag = 'scoped memory for simple_nn_forward.1']
    %12 = vsyncpa [#allocation3], 0
    %13 = vsyncpa [#allocation5], 0
    // Predicated region
    $region2: #{simple_nn_forward.1} parent=1 // pred_check
      _
    $region3: #{simple_nn_forward.1} parent=1 // pred_check_branch
      %15 = sbr.rel (0) target = $region5
    $region4: #{simple_nn_forward.1} parent=1 // pred_region
      _
    $region5: #{simple_nn_forward.1} parent=1 // pred_fallthru
      _
    // Predicated region
    $region6: #{simple_nn_forward.1} parent=1 // pred_check
      _
    $region7: #{simple_nn_forward.1} parent=1 // pred_check_branch
      %17 = sbr.rel (0) target = $region9
    $region8: #{simple_nn_forward.1} parent=1 // pred_region
      _
    $region9: #{simple_nn_forward.1} parent=1 // pred_fallthru
      _
    // Predicated region
    $region10: #{simple_nn_forward.1} parent=1 // pred_check
      _
    $region11: #{simple_nn_forward.1} parent=1 // pred_check_branch
      %19 = sbr.rel (0) target = $region13
    $region12: #{simple_nn_forward.1} parent=1 // pred_region
      _
    $region13: #{simple_nn_forward.1} parent=1 // pred_fallthru
      _
    // Predicated region
    $region14: #{simple_nn_forward.1} parent=1 // pred_check
      _
    $region15: #{simple_nn_forward.1} parent=1 // pred_check_branch
      %21 = sbr.rel (0) target = $region17
    $region16: #{simple_nn_forward.1} parent=1 // pred_region
      %s23 = ssub.s32 4096, 4096
      %24 = vsyncadd [#allocation3], %s23
      %s25 = sshll.u32 [#allocation2], 4
      %s26 = int_to_ptr.vmem [resolvable:$true] %s25
      %31 = dma.hbm_to_vmem [thread:$0]  %s3, 4096, %s26, [#allocation3], 128, 128, 8
    $region17: #{simple_nn_forward.1} parent=1 // pred_fallthru
      _
    // Predicated region
    $region18: #{simple_nn_forward.1} parent=1 // pred_check
      _
    $region19: #{simple_nn_forward.1} parent=1 // pred_check_branch
      %33 = sbr.rel (0) target = $region21
    $region20: #{simple_nn_forward.1} parent=1 // pred_region
      _
    $region21: #{simple_nn_forward.1} parent=1 // pred_fallthru
      _
    // Predicated region
    $region22: #{simple_nn_forward.1} parent=1 // pred_check
      _
    $region23: #{simple_nn_forward.1} parent=1 // pred_check_branch
      %35 = sbr.rel (0) target = $region25
    $region24: #{simple_nn_forward.1} parent=1 // pred_region
      %s37 = ssub.s32 2048, 2048
      %38 = vsyncadd [#allocation5], %s37
      %s39 = sshll.u32 [#allocation4], 4
      %s40 = int_to_ptr.vmem [resolvable:$true] %s39
      %45 = dma.hbm_to_vmem [thread:$0]  %s5, 2048, %s40, [#allocation5], 64, 64, 4
    $region25: #{simple_nn_forward.1} parent=1 // pred_fallthru
      _
    // Predicated region
    $region26: #{simple_nn_forward.1} parent=1 // pred_check
      _
    $region27: #{simple_nn_forward.1} parent=1 // pred_check_branch
      %47 = sbr.rel (0) target = $region29
    $region28: #{simple_nn_forward.1} parent=1 // pred_region
      _
    $region29: #{simple_nn_forward.1} parent=1 // pred_fallthru
      _
    // Predicated region
    $region30: #{simple_nn_forward.1} parent=1 // pred_check
      _
    $region31: #{simple_nn_forward.1} parent=1 // pred_check_branch
      %49 = sbr.rel (0) target = $region33
    $region32: #{simple_nn_forward.1} parent=1 // pred_region
      %50 = dma.done [#allocation3], 4096
    $region33: #{simple_nn_forward.1} parent=1 // pred_fallthru
      _
    // Predicated region
    $region34: #{simple_nn_forward.1} parent=1 // pred_check
      _
    $region35: #{simple_nn_forward.1} parent=1 // pred_check_branch
      %52 = sbr.rel (0) target = $region37
    $region36: #{simple_nn_forward.1} parent=1 // pred_region
      %53 = dma.done [#allocation5], 2048
    $region37: #{simple_nn_forward.1} parent=1 // pred_fallthru
      _
    %v55 = vld [vmem:[%s0] sm:$0xff]
    %v56 = vld [vmem:[%s1] sm:$0x77]
    %v57 = vld [vmem:[%s2] sm:$0x3]
    %v59 = vlaneseq
    %v60 = vshrl.u32 %v59, 7
    %v61 = vsub.s32 0, %v60
    %v62 = vrot.slane %v57, %v61
    %v63 = vlaneseq
    %v64 = vshrl.u32 %v63, 7
    %v65 = vsub.s32 1, %v64
    %v66 = vrot.slane %v57, %v65
    %v70 = vcombine.high %v56, %v56
    %vm71 = vcmask 23552
    %v73 = vsel %vm71, %v55, 0
    %vm75 = vcmask 1042432
    %v76 = vsel %vm75, %v56, 0
    %v78 = vsel %vm75, %v70, 0
    %80 = vmatprep.subr.mxu0 %v78
    %81 = vmatpush1.msra.mxu0 %v76
    %82 = vmatprep.subr.mxu0 0.0
    %83 = vmatpush1.msra.mxu0 0.0
    %84 = vmatprep.subr.mxu0 0.0
    %85 = vmatpush1.msra.mxu0 0.0
    %86 = vmatprep.subr.mxu0 0.0
    %87 = vmatpush1.msra.mxu0 0.0
    %88 = vmatprep.subr.mxu0 0.0
    %89 = vmatpush1.msra.mxu0 0.0
    %90 = vmatprep.subr.mxu0 0.0
    %91 = vmatpush1.msra.mxu0 0.0
    %92 = vmatprep.subr.mxu0 0.0
    %93 = vmatpush1.msra.mxu0 0.0
    %94 = vmatprep.subr.mxu0 0.0
    %95 = vmatpush1.msra.mxu0 0.0
    %96 = vmatprep.subr.mxu0 0.0
    %97 = vmatpush1.msra.mxu0 0.0
    %98 = vmatprep.subr.mxu0 0.0
    %99 = vmatpush1.msra.mxu0 0.0
    %100 = vmatprep.subr.mxu0 0.0
    %101 = vmatpush1.msra.mxu0 0.0
    %102 = vmatprep.subr.mxu0 0.0
    %103 = vmatpush1.msra.mxu0 0.0
    %104 = vmatprep.subr.mxu0 0.0
    %105 = vmatpush1.msra.mxu0 0.0
    %106 = vmatprep.subr.mxu0 0.0
    %107 = vmatpush1.msra.mxu0 0.0
    %108 = vmatprep.subr.mxu0 0.0
    %109 = vmatpush1.msra.mxu0 0.0
    %110 = vmatprep.subr.mxu0 0.0
    %111 = vmatpush1.msra.mxu0 0.0
    %112 = vmatprep.subr.mxu0 0.0
    %113 = vmatpush1.msra.mxu0 0.0
    %114 = vmatprep.subr.mxu0 0.0
    %115 = vmatpush1.msra.mxu0 0.0
    %116 = vmatprep.subr.mxu0 0.0
    %117 = vmatpush1.msra.mxu0 0.0
    %118 = vmatprep.subr.mxu0 0.0
    %119 = vmatpush1.msra.mxu0 0.0
    %120 = vmatprep.subr.mxu0 0.0
    %121 = vmatpush1.msra.mxu0 0.0
    %122 = vmatprep.subr.mxu0 0.0
    %123 = vmatpush1.msra.mxu0 0.0
    %124 = vmatprep.subr.mxu0 0.0
    %125 = vmatpush1.msra.mxu0 0.0
    %126 = vmatprep.subr.mxu0 0.0
    %127 = vmatpush1.msra.mxu0 0.0
    %128 = vmatprep.subr.mxu0 0.0
    %129 = vmatpush1.msra.mxu0 0.0
    %130 = vmatprep.subr.mxu0 0.0
    %131 = vmatpush1.msra.mxu0 0.0
    %132 = vmatprep.subr.mxu0 0.0
    %133 = vmatpush1.msra.mxu0 0.0
    %134 = vmatprep.subr.mxu0 0.0
    %135 = vmatpush1.msra.mxu0 0.0
    %136 = vmatprep.subr.mxu0 0.0
    %137 = vmatpush1.msra.mxu0 0.0
    %138 = vmatprep.subr.mxu0 0.0
    %139 = vmatpush1.msra.mxu0 0.0
    %140 = vmatprep.subr.mxu0 0.0
    %141 = vmatpush1.msra.mxu0 0.0
    %142 = vmatprep.subr.mxu0 0.0
    %143 = vmatpush1.msra.mxu0 0.0
    %144 = vmatprep.mubr.f32.mxu0 0.0
    %145 = vmatmul.mubr.f32.gmra.mrb[0].mxu0 %v73
    %v146 = vpop.f32.mrb[0].mxu0
    %v147 = vadd.f32 %v62, %v146
    %v148 = vpop.f32.mrb[0].mxu0
    %v149 = vadd.f32 %v66, %v148
    %150 = vdwg.mxu0
    %v151 = vmax.f32 %v147, 0.0
    %v152 = vmax.f32 %v149, 0.0
    %v153 = vpack.c.bf16 %v151, %v151
    %v154 = vpack.c.bf16 %v152, %v152
    %v155 = vld [vmem:[#allocation2] sm:$0xff]
    %v156 = vld [vmem:[#allocation2 + $0x8] sm:$0xff]
    %v157 = vld [vmem:[#allocation2 + $0x10] sm:$0xff]
    %v158 = vld [vmem:[#allocation2 + $0x18] sm:$0xff]
    %v159 = vld [vmem:[#allocation2 + $0x20] sm:$0xff]
    %v160 = vld [vmem:[#allocation2 + $0x28] sm:$0xff]
    %v161 = vld [vmem:[#allocation2 + $0x30] sm:$0xff]
    %v162 = vld [vmem:[#allocation2 + $0x38] sm:$0xff]
    %v163 = vld [vmem:[#allocation2 + $0x40] sm:$0xff]
    %v164 = vld [vmem:[#allocation2 + $0x48] sm:$0xff]
    %v165 = vld [vmem:[#allocation2 + $0x50] sm:$0xff]
    %v166 = vld [vmem:[#allocation2 + $0x58] sm:$0xff]
    %v167 = vld [vmem:[#allocation2 + $0x60] sm:$0xff]
    %v168 = vld [vmem:[#allocation2 + $0x68] sm:$0xff]
    %v169 = vld [vmem:[#allocation2 + $0x70] sm:$0xff]
    %v170 = vld [vmem:[#allocation2 + $0x78] sm:$0xff]
    %v171 = vld [vmem:[#allocation2 + $0x80] sm:$0xff]
    %v172 = vld [vmem:[#allocation2 + $0x88] sm:$0xff]
    %v173 = vld [vmem:[#allocation2 + $0x90] sm:$0xff]
    %v174 = vld [vmem:[#allocation2 + $0x98] sm:$0xff]
    %v175 = vld [vmem:[#allocation2 + $0xa0] sm:$0xff]
    %v176 = vld [vmem:[#allocation2 + $0xa8] sm:$0xff]
    %v177 = vld [vmem:[#allocation2 + $0xb0] sm:$0xff]
    %v178 = vld [vmem:[#allocation2 + $0xb8] sm:$0xff]
    %v179 = vld [vmem:[#allocation2 + $0xc0] sm:$0xff]
    %v180 = vld [vmem:[#allocation2 + $0xc8] sm:$0xff]
    %v181 = vld [vmem:[#allocation2 + $0xd0] sm:$0xff]
    %v182 = vld [vmem:[#allocation2 + $0xd8] sm:$0xff]
    %v183 = vld [vmem:[#allocation2 + $0xe0] sm:$0xff]
    %v184 = vld [vmem:[#allocation2 + $0xe8] sm:$0xff]
    %v185 = vld [vmem:[#allocation2 + $0xf0] sm:$0xff]
    %v186 = vld [vmem:[#allocation2 + $0xf8] sm:$0xff]
    %v187 = vld [vmem:[%s4] sm:$0x3]
    %v189 = vlaneseq
    %v190 = vshrl.u32 %v189, 7
    %v191 = vsub.s32 0, %v190
    %v192 = vrot.slane %v187, %v191
    %v193 = vlaneseq
    %v194 = vshrl.u32 %v193, 7
    %v195 = vsub.s32 1, %v194
    %v196 = vrot.slane %v187, %v195
    %v231 = vunpack.c.l.b16 %v155
    %v232 = vunpack.c.h.b16 %v155
    %v233 = vunpack.c.l.b16 %v156
    %v234 = vunpack.c.h.b16 %v156
    %v235 = vunpack.c.l.b16 %v157
    %v236 = vunpack.c.h.b16 %v157
    %v237 = vunpack.c.l.b16 %v158
    %v238 = vunpack.c.h.b16 %v158
    %v239 = vunpack.c.l.b16 %v159
    %v240 = vunpack.c.h.b16 %v159
    %v241 = vunpack.c.l.b16 %v160
    %v242 = vunpack.c.h.b16 %v160
    %v243 = vunpack.c.l.b16 %v161
    %v244 = vunpack.c.h.b16 %v161
    %v245 = vunpack.c.l.b16 %v162
    %v246 = vunpack.c.h.b16 %v162
    %v247 = vunpack.c.l.b16 %v163
    %v248 = vunpack.c.h.b16 %v163
    %v249 = vunpack.c.l.b16 %v164
    %v250 = vunpack.c.h.b16 %v164
    %v251 = vunpack.c.l.b16 %v165
    %v252 = vunpack.c.h.b16 %v165
    %v253 = vunpack.c.l.b16 %v166
    %v254 = vunpack.c.h.b16 %v166
    %v255 = vunpack.c.l.b16 %v167
    %v256 = vunpack.c.h.b16 %v167
    %v257 = vunpack.c.l.b16 %v168
    %v258 = vunpack.c.h.b16 %v168
    %v259 = vunpack.c.l.b16 %v169
    %v260 = vunpack.c.h.b16 %v169
    %v261 = vunpack.c.l.b16 %v170
    %v262 = vunpack.c.h.b16 %v170
    %v263 = vunpack.c.l.b16 %v171
    %v264 = vunpack.c.h.b16 %v171
    %v265 = vunpack.c.l.b16 %v172
    %v266 = vunpack.c.h.b16 %v172
    %v267 = vunpack.c.l.b16 %v173
    %v268 = vunpack.c.h.b16 %v173
    %v269 = vunpack.c.l.b16 %v174
    %v270 = vunpack.c.h.b16 %v174
    %v271 = vunpack.c.l.b16 %v175
    %v272 = vunpack.c.h.b16 %v175
    %v273 = vunpack.c.l.b16 %v176
    %v274 = vunpack.c.h.b16 %v176
    %v275 = vunpack.c.l.b16 %v177
    %v276 = vunpack.c.h.b16 %v177
    %v277 = vunpack.c.l.b16 %v178
    %v278 = vunpack.c.h.b16 %v178
    %v279 = vunpack.c.l.b16 %v179
    %v280 = vunpack.c.h.b16 %v179
    %v281 = vunpack.c.l.b16 %v180
    %v282 = vunpack.c.h.b16 %v180
    %v283 = vunpack.c.l.b16 %v181
    %v284 = vunpack.c.h.b16 %v181
    %v285 = vunpack.c.l.b16 %v182
    %v286 = vunpack.c.h.b16 %v182
    %v287 = vunpack.c.l.b16 %v183
    %v288 = vunpack.c.h.b16 %v183
    %v289 = vunpack.c.l.b16 %v184
    %v290 = vunpack.c.h.b16 %v184
    %v291 = vunpack.c.l.b16 %v185
    %v292 = vunpack.c.h.b16 %v185
    %v293 = vunpack.c.l.b16 %v186
    %v294 = vunpack.c.h.b16 %v186
    %v295 = vpack.c.b16 %v233, %v231
    %v296 = vpack.c.b16 %v234, %v232
    %v297 = vpack.c.b16 %v237, %v235
    %v298 = vpack.c.b16 %v238, %v236
    %v299 = vpack.c.b16 %v241, %v239
    %v300 = vpack.c.b16 %v242, %v240
    %v301 = vpack.c.b16 %v245, %v243
    %v302 = vpack.c.b16 %v246, %v244
    %v303 = vpack.c.b16 %v249, %v247
    %v304 = vpack.c.b16 %v250, %v248
    %v305 = vpack.c.b16 %v253, %v251
    %v306 = vpack.c.b16 %v254, %v252
    %v307 = vpack.c.b16 %v257, %v255
    %v308 = vpack.c.b16 %v258, %v256
    %v309 = vpack.c.b16 %v261, %v259
    %v310 = vpack.c.b16 %v262, %v260
    %v311 = vpack.c.b16 %v265, %v263
    %v312 = vpack.c.b16 %v266, %v264
    %v313 = vpack.c.b16 %v269, %v267
    %v314 = vpack.c.b16 %v270, %v268
    %v315 = vpack.c.b16 %v273, %v271
    %v316 = vpack.c.b16 %v274, %v272
    %v317 = vpack.c.b16 %v277, %v275
    %v318 = vpack.c.b16 %v278, %v276
    %v319 = vpack.c.b16 %v281, %v279
    %v320 = vpack.c.b16 %v282, %v280
    %v321 = vpack.c.b16 %v285, %v283
    %v322 = vpack.c.b16 %v286, %v284
    %v323 = vpack.c.b16 %v289, %v287
    %v324 = vpack.c.b16 %v290, %v288
    %v325 = vpack.c.b16 %v293, %v291
    %v326 = vpack.c.b16 %v294, %v292
    %359 = vmatprep.subr.bf16.mxu0 %v296
    %360 = vmatpush1.bf16.msra.mxu0 %v295
    %361 = vmatprep.subr.bf16.mxu0 %v298
    %362 = vmatpush1.bf16.msra.mxu0 %v297
    %363 = vmatprep.subr.bf16.mxu0 %v300
    %364 = vmatpush1.bf16.msra.mxu0 %v299
    %365 = vmatprep.subr.bf16.mxu0 %v302
    %366 = vmatpush1.bf16.msra.mxu0 %v301
    %367 = vmatprep.subr.bf16.mxu0 %v304
    %368 = vmatpush1.bf16.msra.mxu0 %v303
    %369 = vmatprep.subr.bf16.mxu0 %v306
    %370 = vmatpush1.bf16.msra.mxu0 %v305
    %371 = vmatprep.subr.bf16.mxu0 %v308
    %372 = vmatpush1.bf16.msra.mxu0 %v307
    %373 = vmatprep.subr.bf16.mxu0 %v310
    %374 = vmatpush1.bf16.msra.mxu0 %v309
    %375 = vmatprep.subr.bf16.mxu0 %v312
    %376 = vmatpush1.bf16.msra.mxu0 %v311
    %377 = vmatprep.subr.bf16.mxu0 %v314
    %378 = vmatpush1.bf16.msra.mxu0 %v313
    %379 = vmatprep.subr.bf16.mxu0 %v316
    %380 = vmatpush1.bf16.msra.mxu0 %v315
    %381 = vmatprep.subr.bf16.mxu0 %v318
    %382 = vmatpush1.bf16.msra.mxu0 %v317
    %383 = vmatprep.subr.bf16.mxu0 %v320
    %384 = vmatpush1.bf16.msra.mxu0 %v319
    %385 = vmatprep.subr.bf16.mxu0 %v322
    %386 = vmatpush1.bf16.msra.mxu0 %v321
    %387 = vmatprep.subr.bf16.mxu0 %v324
    %388 = vmatpush1.bf16.msra.mxu0 %v323
    %389 = vmatprep.subr.bf16.mxu0 %v326
    %390 = vmatpush1.bf16.msra.mxu0 %v325
    %391 = vmatprep.mubr.bf16.mxu0 %v154
    %392 = vmatmul.mubr.bf16.gmra.mrb[0].mxu0 %v153
    %v393 = vpop.f32.mrb[0].mxu0
    %v394 = vadd.f32 %v192, %v393
    %v395 = vpop.f32.mrb[0].mxu0
    %v396 = vadd.f32 %v196, %v395
    %v397 = vpop.f32.mrb[0].mxu0
    %v398 = vpop.f32.mrb[0].mxu0
    %399 = vdwg.mxu0
    %v400 = vmax.f32 %v394, 0.0
    %v401 = vmax.f32 %v396, 0.0
    %v402 = vpack.c.bf16 %v400, %v400
    %v403 = vpack.c.bf16 %v401, %v401
    %v404 = vld [vmem:[#allocation4] sm:$0xf]
    %v405 = vld [vmem:[#allocation4 + $0x4] sm:$0xf]
    %v406 = vld [vmem:[#allocation4 + $0x8] sm:$0xf]
    %v407 = vld [vmem:[#allocation4 + $0xc] sm:$0xf]
    %v408 = vld [vmem:[#allocation4 + $0x10] sm:$0xf]
    %v409 = vld [vmem:[#allocation4 + $0x14] sm:$0xf]
    %v410 = vld [vmem:[#allocation4 + $0x18] sm:$0xf]
    %v411 = vld [vmem:[#allocation4 + $0x1c] sm:$0xf]
    %v412 = vld [vmem:[#allocation4 + $0x20] sm:$0xf]
    %v413 = vld [vmem:[#allocation4 + $0x24] sm:$0xf]
    %v414 = vld [vmem:[#allocation4 + $0x28] sm:$0xf]
    %v415 = vld [vmem:[#allocation4 + $0x2c] sm:$0xf]
    %v416 = vld [vmem:[#allocation4 + $0x30] sm:$0xf]
    %v417 = vld [vmem:[#allocation4 + $0x34] sm:$0xf]
    %v418 = vld [vmem:[#allocation4 + $0x38] sm:$0xf]
    %v419 = vld [vmem:[#allocation4 + $0x3c] sm:$0xf]
    %v420 = vld [vmem:[#allocation4 + $0x40] sm:$0xf]
    %v421 = vld [vmem:[#allocation4 + $0x44] sm:$0xf]
    %v422 = vld [vmem:[#allocation4 + $0x48] sm:$0xf]
    %v423 = vld [vmem:[#allocation4 + $0x4c] sm:$0xf]
    %v424 = vld [vmem:[#allocation4 + $0x50] sm:$0xf]
    %v425 = vld [vmem:[#allocation4 + $0x54] sm:$0xf]
    %v426 = vld [vmem:[#allocation4 + $0x58] sm:$0xf]
    %v427 = vld [vmem:[#allocation4 + $0x5c] sm:$0xf]
    %v428 = vld [vmem:[#allocation4 + $0x60] sm:$0xf]
    %v429 = vld [vmem:[#allocation4 + $0x64] sm:$0xf]
    %v430 = vld [vmem:[#allocation4 + $0x68] sm:$0xf]
    %v431 = vld [vmem:[#allocation4 + $0x6c] sm:$0xf]
    %v432 = vld [vmem:[#allocation4 + $0x70] sm:$0xf]
    %v433 = vld [vmem:[#allocation4 + $0x74] sm:$0xf]
    %v434 = vld [vmem:[#allocation4 + $0x78] sm:$0xf]
    %v435 = vld [vmem:[#allocation4 + $0x7c] sm:$0xf]
    %v468 = vunpack.c.l.b16 %v404
    %v469 = vunpack.c.l.b16 %v405
    %v470 = vunpack.c.l.b16 %v406
    %v471 = vunpack.c.l.b16 %v407
    %v472 = vunpack.c.l.b16 %v408
    %v473 = vunpack.c.l.b16 %v409
    %v474 = vunpack.c.l.b16 %v410
    %v475 = vunpack.c.l.b16 %v411
    %v476 = vunpack.c.l.b16 %v412
    %v477 = vunpack.c.l.b16 %v413
    %v478 = vunpack.c.l.b16 %v414
    %v479 = vunpack.c.l.b16 %v415
    %v480 = vunpack.c.l.b16 %v416
    %v481 = vunpack.c.l.b16 %v417
    %v482 = vunpack.c.l.b16 %v418
    %v483 = vunpack.c.l.b16 %v419
    %v484 = vunpack.c.l.b16 %v420
    %v485 = vunpack.c.l.b16 %v421
    %v486 = vunpack.c.l.b16 %v422
    %v487 = vunpack.c.l.b16 %v423
    %v488 = vunpack.c.l.b16 %v424
    %v489 = vunpack.c.l.b16 %v425
    %v490 = vunpack.c.l.b16 %v426
    %v491 = vunpack.c.l.b16 %v427
    %v492 = vunpack.c.l.b16 %v428
    %v493 = vunpack.c.l.b16 %v429
    %v494 = vunpack.c.l.b16 %v430
    %v495 = vunpack.c.l.b16 %v431
    %v496 = vunpack.c.l.b16 %v432
    %v497 = vunpack.c.l.b16 %v433
    %v498 = vunpack.c.l.b16 %v434
    %v499 = vunpack.c.l.b16 %v435
    %v500 = vpack.c.b16 %v469, %v468
    %v501 = vpack.c.b16 %v471, %v470
    %v502 = vpack.c.b16 %v473, %v472
    %v503 = vpack.c.b16 %v475, %v474
    %v504 = vpack.c.b16 %v477, %v476
    %v505 = vpack.c.b16 %v479, %v478
    %v506 = vpack.c.b16 %v481, %v480
    %v507 = vpack.c.b16 %v483, %v482
    %v508 = vpack.c.b16 %v485, %v484
    %v509 = vpack.c.b16 %v487, %v486
    %v510 = vpack.c.b16 %v489, %v488
    %v511 = vpack.c.b16 %v491, %v490
    %v512 = vpack.c.b16 %v493, %v492
    %v513 = vpack.c.b16 %v495, %v494
    %v514 = vpack.c.b16 %v497, %v496
    %v515 = vpack.c.b16 %v499, %v498
    %532 = vmatprep.subr.bf16.mxu0 0
    %533 = vmatpush1.bf16.msra.mxu0 %v500
    %534 = vmatprep.subr.bf16.mxu0 0
    %535 = vmatpush1.bf16.msra.mxu0 %v501
    %536 = vmatprep.subr.bf16.mxu0 0
    %537 = vmatpush1.bf16.msra.mxu0 %v502
    %538 = vmatprep.subr.bf16.mxu0 0
    %539 = vmatpush1.bf16.msra.mxu0 %v503
    %540 = vmatprep.subr.bf16.mxu0 0
    %541 = vmatpush1.bf16.msra.mxu0 %v504
    %542 = vmatprep.subr.bf16.mxu0 0
    %543 = vmatpush1.bf16.msra.mxu0 %v505
    %544 = vmatprep.subr.bf16.mxu0 0
    %545 = vmatpush1.bf16.msra.mxu0 %v506
    %546 = vmatprep.subr.bf16.mxu0 0
    %547 = vmatpush1.bf16.msra.mxu0 %v507
    %548 = vmatprep.subr.bf16.mxu0 0
    %549 = vmatpush1.bf16.msra.mxu0 %v508
    %550 = vmatprep.subr.bf16.mxu0 0
    %551 = vmatpush1.bf16.msra.mxu0 %v509
    %552 = vmatprep.subr.bf16.mxu0 0
    %553 = vmatpush1.bf16.msra.mxu0 %v510
    %554 = vmatprep.subr.bf16.mxu0 0
    %555 = vmatpush1.bf16.msra.mxu0 %v511
    %556 = vmatprep.subr.bf16.mxu0 0
    %557 = vmatpush1.bf16.msra.mxu0 %v512
    %558 = vmatprep.subr.bf16.mxu0 0
    %559 = vmatpush1.bf16.msra.mxu0 %v513
    %560 = vmatprep.subr.bf16.mxu0 0
    %561 = vmatpush1.bf16.msra.mxu0 %v514
    %562 = vmatprep.subr.bf16.mxu0 0
    %563 = vmatpush1.bf16.msra.mxu0 %v515
    %564 = vmatprep.mubr.bf16.mxu0 %v403
    %565 = vmatmul.mubr.bf16.gmra.mrb[0].mxu0 %v402
    %v566 = vpop.f32.mrb[0].mxu0
    %v567 = vadd.f32 0.0, %v566
    %v568 = vpop.f32.mrb[0].mxu0
    %v569 = vpop.f32.mrb[0].mxu0
    %v570 = vpop.f32.mrb[0].mxu0
    %571 = vdwg.mxu0
    %v572 = vld [vmem:[%s6] sm:$0x1]
    %v574 = vlaneseq
    %v575 = vshrl.u32 %v574, 7
    %v576 = vsub.s32 0, %v575
    %v577 = vrot.slane %v572, %v576
    %v579 = vadd.f32 %v567, %v577
    %vm580 = vcmask 15360
    %581 = vst.msk [vmem:[%s7] sm:$0xff] %vm580, %v579
    // Predicated region
    $region38: #{simple_nn_forward.1} parent=1 // pred_check
      _
    $region39: #{simple_nn_forward.1} parent=1 // pred_check_branch
      %583 = sbr.rel (0) target = $region41
    $region40: #{simple_nn_forward.1} parent=1 // pred_region
      _
    $region41: #{simple_nn_forward.1} parent=1 // pred_fallthru
      _
    // Predicated region
    $region42: #{simple_nn_forward.1} parent=1 // pred_check
      _
    $region43: #{simple_nn_forward.1} parent=1 // pred_check_branch
      %585 = sbr.rel (0) target = $region45
    $region44: #{simple_nn_forward.1} parent=1 // pred_region
      _
    $region45: #{simple_nn_forward.1} parent=1 // pred_fallthru
      _
    %586 = vsyncpa [#allocation3], 1
    %587 = vsyncpa [#allocation5], 1

</llo_original>
